<compile_context>
chip_gen: v7x
topology: tpu7x:2x2x1
jax: 0.10.0
libtpu: 0.0.40
codegen_flags: <defaults>
</compile_context>

<pallas_src>
import functools

import jax
import jax.numpy as jnp
from jax.experimental import pallas as pl
from jax.experimental.pallas import tpu as pltpu

_LANE = 128          # TPU lane width (last dim of every vreg)
_SUBLANE_PACK = 32   # row-tile granularity: covers f32 (8), bf16 (16), int8 (32)
_PAD_LOGIT = -1e30   # exp(-|pad|) == 0 exactly -> bce term == 0 and sigmoid == 0


def _bce_dice_kernel(x_ref, t_ref,
                     bce_ref, p_ref, ts_ref, inter_ref,
                     bce_acc, p_acc, ts_acc, inter_acc):
    k = pl.program_id(1)

    @pl.when(k == 0)
    def _():
        bce_acc[...] = jnp.zeros_like(bce_acc)
        p_acc[...] = jnp.zeros_like(p_acc)
        ts_acc[...] = jnp.zeros_like(ts_acc)
        inter_acc[...] = jnp.zeros_like(inter_acc)

    x = x_ref[...].astype(jnp.float32)   # (N, rows, 128) logits tile
    t = t_ref[...].astype(jnp.float32)   # (N, rows, 128) target tile

    # Numerically-stable BCE with logits, reusing one exp for the sigmoid:
    #   e       = exp(-|x|)                       (single EUP exp per element)
    #   bce     = max(x, 0) - x*t + log1p(e)
    #   sigmoid = 1/(1+e)   if x >= 0  else  e/(1+e)
    e = jnp.exp(-jnp.abs(x))
    bce = jnp.maximum(x, 0.0) - x * t + jnp.log1p(e)
    r = 1.0 / (1.0 + e)
    p = jnp.where(x >= 0.0, r, e * r)

    # Per-step reduction only over the sublane (row) axis; lanes stay resident
    # in the (N, 128) accumulators, so there is no per-step cross-lane reduce
    # and no per-step narrow masked store.
    bce_acc[...] += jnp.sum(bce, axis=1)
    p_acc[...] += jnp.sum(p, axis=1)
    ts_acc[...] += jnp.sum(t, axis=1)
    inter_acc[...] += jnp.sum(p * t, axis=1)

    @pl.when(k == pl.num_programs(1) - 1)
    def _():
        bce_ref[0] = bce_acc[...]
        p_ref[0] = p_acc[...]
        ts_ref[0] = ts_acc[...]
        inter_ref[0] = inter_acc[...]


def _round_up(x, m):
    return ((x + m - 1) // m) * m


@functools.partial(jax.jit, static_argnames=("block_rows", "num_splits"))
def bce_dice_loss(logits, target, *, block_rows=None, num_splits=2):
    """Returns (0.5*bce + dice_loss, dice.mean(), iou), matching the PyTorch module."""
    n = logits.shape[0]
    x2 = logits.reshape(n, -1)          # keep input dtype (bf16 inputs stay bf16)
    t2 = target.reshape(n, -1)
    d = x2.shape[1]

    p_splits = max(int(num_splits), 1)
    r_total = pl.cdiv(d, _LANE)         # 128-lane rows per batch element

    if block_rows is None:
        # Target ~2 MiB (f32) per input block: per-step DMA time is well above
        # the ~0.35 us fixed grid-step overhead, while one block's f32
        # intermediates stay far under the VMEM budget on every generation.
        cap = (2 * 1024 * 1024) // (n * _LANE * 4)
        cap = max(_SUBLANE_PACK, (cap // _SUBLANE_PACK) * _SUBLANE_PACK)
        br0 = min(cap, _round_up(pl.cdiv(r_total, p_splits), _SUBLANE_PACK))
        n_steps = pl.cdiv(r_total, p_splits * br0)
        block_rows = _round_up(pl.cdiv(r_total, p_splits * n_steps), _SUBLANE_PACK)
    else:
        block_rows = max(_SUBLANE_PACK, _round_up(int(block_rows), _SUBLANE_PACK))
        n_steps = pl.cdiv(r_total, p_splits * block_rows)

    r_pad = p_splits * n_steps * block_rows
    d_pad = r_pad * _LANE

    # Pad so the block grid tiles exactly.  Padded logits are a huge negative
    # value and padded targets are 0, so padded elements contribute exactly 0
    # to all four reductions (no full-D fallback, no VMEM blow-up).
    if d_pad != d:
        x2 = jnp.pad(x2, ((0, 0), (0, d_pad - d)), constant_values=_PAD_LOGIT)
        t2 = jnp.pad(t2, ((0, 0), (0, d_pad - d)), constant_values=0)
    x3 = x2.reshape(n, r_pad, _LANE)
    t3 = t2.reshape(n, r_pad, _LANE)

    in_spec = pl.BlockSpec((n, block_rows, _LANE),
                           lambda p, k: (0, p * n_steps + k, 0))
    out_spec = pl.BlockSpec((1, n, _LANE), lambda p, k: (p, 0, 0))
    part_shape = jax.ShapeDtypeStruct((p_splits, n, _LANE), jnp.float32)

    bce_p, p_p, t_p, inter_p = pl.pallas_call(
        _bce_dice_kernel,
        out_shape=(part_shape,) * 4,
        grid_spec=pltpu.PrefetchScalarGridSpec(
            num_scalar_prefetch=0,
            grid=(p_splits, n_steps),
            in_specs=[in_spec, in_spec],
            out_specs=[out_spec] * 4,
            scratch_shapes=[pltpu.VMEM((n, _LANE), jnp.float32)] * 4,
        ),
        compiler_params=pltpu.CompilerParams(
            dimension_semantics=("parallel", "arbitrary"),
            vmem_limit_bytes=48 * 1024 * 1024,
        ),
    )(x3, t3)

    # Final (tiny) cross-lane / cross-split reductions and scalar math in JAX.
    bce_s = jnp.sum(bce_p, axis=(0, 2))
    p_s = jnp.sum(p_p, axis=(0, 2))
    t_s = jnp.sum(t_p, axis=(0, 2))
    inter_s = jnp.sum(inter_p, axis=(0, 2))

    smooth = 1e-05
    num = jnp.float32(n)
    total_elems = jnp.float32(n * d)        # original (un-padded) element count

    bce = jnp.sum(bce_s) / total_elems                      # mean-reduced BCE
    dice = (2.0 * inter_s + smooth) / (p_s + t_s + smooth)  # per-row dice
    dice_loss = 1.0 - jnp.sum(dice) / num
    iou = (inter_s + smooth) / (p_s + t_s - inter_s + smooth)
    iou = jnp.sum(iou) / num

    return 0.5 * bce + dice_loss, jnp.mean(dice), iou


def _reference(logits, target):
    """Pure-JAX reference of the PyTorch forward (for sanity check)."""
    x = logits.astype(jnp.float32)
    t = target.astype(jnp.float32)
    bce = jnp.mean(jnp.maximum(x, 0.0) - x * t + jnp.log1p(jnp.exp(-jnp.abs(x))))
    smooth = 1e-05
    n = x.shape[0]
    p = jax.nn.sigmoid(x).reshape(n, -1)
    t2 = t.reshape(n, -1)
    inter = (p * t2).sum(1)
    dice = (2.0 * inter + smooth) / (p.sum(1) + t2.sum(1) + smooth)
    dice_loss = 1.0 - dice.sum() / n
    iou = (inter + smooth) / (p.sum(1) + t2.sum(1) - inter + smooth)
    iou = iou.sum() / n
    return 0.5 * bce + dice_loss, dice.mean(), iou


if __name__ == "__main__":
    # Small NCHW shapes: batch=2, channels=4, spatial=16x16 -> D = 1024.
    key = jax.random.PRNGKey(0)
    k1, k2 = jax.random.split(key)
    logits = jax.random.normal(k1, (2, 4, 16, 16), dtype=jnp.float32)
    target = (jax.random.uniform(k2, (2, 4, 16, 16)) > 0.5).astype(jnp.float32)

    loss, dice_mean, iou = bce_dice_loss(logits, target)
    jax.block_until_ready((loss, dice_mean, iou))

    ref_loss, ref_dice, ref_iou = _reference(logits, target)
    assert jnp.allclose(loss, ref_loss, atol=1e-5, rtol=1e-5)
    assert jnp.allclose(dice_mean, ref_dice, atol=1e-5, rtol=1e-5)
    assert jnp.allclose(iou, ref_iou, atol=1e-5, rtol=1e-5)

    print("KERNEL_OK")
</pallas_src>

<mosaic_0001>
module attributes {stable_mosaic.version = 11 : i64} {
  func.func @_bce_dice_kernel(%arg0: i32, %arg1: i32, %arg2: memref<2x32x128xf32, #tpu.memory_space<vmem>>, %arg3: memref<2x32x128xf32, #tpu.memory_space<vmem>>, %arg4: memref<1x2x128xf32, #tpu.memory_space<vmem>>, %arg5: memref<1x2x128xf32, #tpu.memory_space<vmem>>, %arg6: memref<1x2x128xf32, #tpu.memory_space<vmem>>, %arg7: memref<1x2x128xf32, #tpu.memory_space<vmem>>, %arg8: memref<2x128xf32, #tpu.memory_space<vmem>>, %arg9: memref<2x128xf32, #tpu.memory_space<vmem>>, %arg10: memref<2x128xf32, #tpu.memory_space<vmem>>, %arg11: memref<2x128xf32, #tpu.memory_space<vmem>>) attributes {dimension_semantics = [#tpu.dimension_semantics<parallel>, #tpu.dimension_semantics<arbitrary>], iteration_bounds = array<i64: 2, 1>, scalar_prefetch = 0 : i64, scratch_operands = 4 : i64, tpu.core_type = #tpu.core_type<tc>, window_params = [{transform_indices = @transform_0, window_bounds = array<i64: 2, 32, 128>}, {transform_indices = @transform_1, window_bounds = array<i64: 2, 32, 128>}, {transform_indices = @transform_2, window_bounds = array<i64: 1, 2, 128>}, {transform_indices = @transform_3, window_bounds = array<i64: 1, 2, 128>}, {transform_indices = @transform_4, window_bounds = array<i64: 1, 2, 128>}, {transform_indices = @transform_5, window_bounds = array<i64: 1, 2, 128>}]} {
    %c0_i32 = arith.constant 0 : i32
    %0 = arith.cmpi eq, %arg1, %c0_i32 : i32
    %1 = arith.extui %0 : i1 to i32
    %c0_i32_0 = arith.constant 0 : i32
    %2 = arith.cmpi ne, %1, %c0_i32_0 : i32
    scf.if %2 {
      %cst_32 = arith.constant 0.000000e+00 : f32
      %43 = vector.broadcast %cst_32 : f32 to vector<2x128xf32>
      %c0_33 = arith.constant 0 : index
      %c0_34 = arith.constant 0 : index
      %44 = vector.load %arg8[%c0_33, %c0_34] : memref<2x128xf32, #tpu.memory_space<vmem>>, vector<2x128xf32>
      tpu.vector_store %arg8[%c0_33, %c0_34], %43 {strides = array<i32>} : memref<2x128xf32, #tpu.memory_space<vmem>>, vector<2x128xf32>,
      %cst_35 = arith.constant 0.000000e+00 : f32
      %45 = vector.broadcast %cst_35 : f32 to vector<2x128xf32>
      %c0_36 = arith.constant 0 : index
      %c0_37 = arith.constant 0 : index
      %46 = vector.load %arg9[%c0_36, %c0_37] : memref<2x128xf32, #tpu.memory_space<vmem>>, vector<2x128xf32>
      tpu.vector_store %arg9[%c0_36, %c0_37], %45 {strides = array<i32>} : memref<2x128xf32, #tpu.memory_space<vmem>>, vector<2x128xf32>,
      %cst_38 = arith.constant 0.000000e+00 : f32
      %47 = vector.broadcast %cst_38 : f32 to vector<2x128xf32>
      %c0_39 = arith.constant 0 : index
      %c0_40 = arith.constant 0 : index
      %48 = vector.load %arg10[%c0_39, %c0_40] : memref<2x128xf32, #tpu.memory_space<vmem>>, vector<2x128xf32>
      tpu.vector_store %arg10[%c0_39, %c0_40], %47 {strides = array<i32>} : memref<2x128xf32, #tpu.memory_space<vmem>>, vector<2x128xf32>,
      %cst_41 = arith.constant 0.000000e+00 : f32
      %49 = vector.broadcast %cst_41 : f32 to vector<2x128xf32>
      %c0_42 = arith.constant 0 : index
      %c0_43 = arith.constant 0 : index
      %50 = vector.load %arg11[%c0_42, %c0_43] : memref<2x128xf32, #tpu.memory_space<vmem>>, vector<2x128xf32>
      tpu.vector_store %arg11[%c0_42, %c0_43], %49 {strides = array<i32>} : memref<2x128xf32, #tpu.memory_space<vmem>>, vector<2x128xf32>,
    } else {
    }
    %c0 = arith.constant 0 : index
    %c0_1 = arith.constant 0 : index
    %c0_2 = arith.constant 0 : index
    %3 = vector.load %arg2[%c0, %c0_1, %c0_2] : memref<2x32x128xf32, #tpu.memory_space<vmem>>, vector<2x32x128xf32>
    %c0_3 = arith.constant 0 : index
    %c0_4 = arith.constant 0 : index
    %c0_5 = arith.constant 0 : index
    %4 = vector.load %arg3[%c0_3, %c0_4, %c0_5] : memref<2x32x128xf32, #tpu.memory_space<vmem>>, vector<2x32x128xf32>
    %5 = math.absf %3 : vector<2x32x128xf32>
    %cst = arith.constant 0.000000e+00 : f32
    %6 = vector.broadcast %cst : f32 to vector<2x32x128xf32>
    %7 = arith.subf %6, %5 : vector<2x32x128xf32>
    %8 = math.exp %7 : vector<2x32x128xf32>
    %cst_6 = arith.constant 0.000000e+00 : f32
    %9 = vector.broadcast %cst_6 : f32 to vector<2x32x128xf32>
    %10 = arith.maximumf %3, %9 : vector<2x32x128xf32>
    %11 = arith.mulf %3, %4 : vector<2x32x128xf32>
    %12 = arith.subf %10, %11 : vector<2x32x128xf32>
    %13 = math.log1p %8 : vector<2x32x128xf32>
    %14 = arith.addf %12, %13 : vector<2x32x128xf32>
    %cst_7 = arith.constant 1.000000e+00 : f32
    %15 = vector.broadcast %cst_7 : f32 to vector<2x32x128xf32>
    %16 = arith.addf %15, %8 : vector<2x32x128xf32>
    %cst_8 = arith.constant 1.000000e+00 : f32
    %17 = vector.broadcast %cst_8 : f32 to vector<2x32x128xf32>
    %18 = arith.divf %17, %16 : vector<2x32x128xf32>
    %cst_9 = arith.constant 0.000000e+00 : f32
    %19 = vector.broadcast %cst_9 : f32 to vector<2x32x128xf32>
    %20 = arith.cmpf oge, %3, %19 : vector<2x32x128xf32>
    %21 = arith.mulf %8, %18 : vector<2x32x128xf32>
    %22 = arith.select %20, %18, %21 : vector<2x32x128xi1>, vector<2x32x128xf32>
    %c0_10 = arith.constant 0 : index
    %c0_11 = arith.constant 0 : index
    %23 = vector.load %arg8[%c0_10, %c0_11] : memref<2x128xf32, #tpu.memory_space<vmem>>, vector<2x128xf32>
    %cst_12 = arith.constant dense<0.000000e+00> : vector<2x128xf32>
    %24 = vector.multi_reduction <add>, %14, %cst_12 [1] : vector<2x32x128xf32> to vector<2x128xf32>
    %25 = arith.addf %23, %24 : vector<2x128xf32>
    %c0_13 = arith.constant 0 : index
    %c0_14 = arith.constant 0 : index
    %26 = vector.load %arg8[%c0_13, %c0_14] : memref<2x128xf32, #tpu.memory_space<vmem>>, vector<2x128xf32>
    tpu.vector_store %arg8[%c0_13, %c0_14], %25 {strides = array<i32>} : memref<2x128xf32, #tpu.memory_space<vmem>>, vector<2x128xf32>,
    %c0_15 = arith.constant 0 : index
    %c0_16 = arith.constant 0 : index
    %27 = vector.load %arg9[%c0_15, %c0_16] : memref<2x128xf32, #tpu.memory_space<vmem>>, vector<2x128xf32>
    %cst_17 = arith.constant dense<0.000000e+00> : vector<2x128xf32>
    %28 = vector.multi_reduction <add>, %22, %cst_17 [1] : vector<2x32x128xf32> to vector<2x128xf32>
    %29 = arith.addf %27, %28 : vector<2x128xf32>
    %c0_18 = arith.constant 0 : index
    %c0_19 = arith.constant 0 : index
    %30 = vector.load %arg9[%c0_18, %c0_19] : memref<2x128xf32, #tpu.memory_space<vmem>>, vector<2x128xf32>
    tpu.vector_store %arg9[%c0_18, %c0_19], %29 {strides = array<i32>} : memref<2x128xf32, #tpu.memory_space<vmem>>, vector<2x128xf32>,
    %c0_20 = arith.constant 0 : index
    %c0_21 = arith.constant 0 : index
    %31 = vector.load %arg10[%c0_20, %c0_21] : memref<2x128xf32, #tpu.memory_space<vmem>>, vector<2x128xf32>
    %cst_22 = arith.constant dense<0.000000e+00> : vector<2x128xf32>
    %32 = vector.multi_reduction <add>, %4, %cst_22 [1] : vector<2x32x128xf32> to vector<2x128xf32>
    %33 = arith.addf %31, %32 : vector<2x128xf32>
    %c0_23 = arith.constant 0 : index
    %c0_24 = arith.constant 0 : index
    %34 = vector.load %arg10[%c0_23, %c0_24] : memref<2x128xf32, #tpu.memory_space<vmem>>, vector<2x128xf32>
    tpu.vector_store %arg10[%c0_23, %c0_24], %33 {strides = array<i32>} : memref<2x128xf32, #tpu.memory_space<vmem>>, vector<2x128xf32>,
    %c0_25 = arith.constant 0 : index
    %c0_26 = arith.constant 0 : index
    %35 = vector.load %arg11[%c0_25, %c0_26] : memref<2x128xf32, #tpu.memory_space<vmem>>, vector<2x128xf32>
    %36 = arith.mulf %22, %4 : vector<2x32x128xf32>
    %cst_27 = arith.constant dense<0.000000e+00> : vector<2x128xf32>
    %37 = vector.multi_reduction <add>, %36, %cst_27 [1] : vector<2x32x128xf32> to vector<2x128xf32>
    %38 = arith.addf %35, %37 : vector<2x128xf32>
    %c0_28 = arith.constant 0 : index
    %c0_29 = arith.constant 0 : index
    %39 = vector.load %arg11[%c0_28, %c0_29] : memref<2x128xf32, #tpu.memory_space<vmem>>, vector<2x128xf32>
    tpu.vector_store %arg11[%c0_28, %c0_29], %38 {strides = array<i32>} : memref<2x128xf32, #tpu.memory_space<vmem>>, vector<2x128xf32>,
    %c0_i32_30 = arith.constant 0 : i32
    %40 = arith.cmpi eq, %arg1, %c0_i32_30 : i32
    %41 = arith.extui %40 : i1 to i32
    %c0_i32_31 = arith.constant 0 : i32
    %42 = arith.cmpi ne, %41, %c0_i32_31 : i32
    scf.if %42 {
      %c0_32 = arith.constant 0 : index
      %c0_33 = arith.constant 0 : index
      %43 = vector.load %arg8[%c0_32, %c0_33] : memref<2x128xf32, #tpu.memory_space<vmem>>, vector<2x128xf32>
      %c0_34 = arith.constant 0 : index
      %c0_35 = arith.constant 0 : index
      %c0_36 = arith.constant 0 : index
      %44 = vector.load %arg4[%c0_34, %c0_35, %c0_36] : memref<1x2x128xf32, #tpu.memory_space<vmem>>, vector<1x2x128xf32>
      %45 = vector.shape_cast %44 : vector<1x2x128xf32> to vector<2x128xf32>
      %46 = vector.shape_cast %43 : vector<2x128xf32> to vector<1x2x128xf32>
      tpu.vector_store %arg4[%c0_34, %c0_35, %c0_36], %46 {strides = array<i32>} : memref<1x2x128xf32, #tpu.memory_space<vmem>>, vector<1x2x128xf32>,
      %c0_37 = arith.constant 0 : index
      %c0_38 = arith.constant 0 : index
      %47 = vector.load %arg9[%c0_37, %c0_38] : memref<2x128xf32, #tpu.memory_space<vmem>>, vector<2x128xf32>
      %c0_39 = arith.constant 0 : index
      %c0_40 = arith.constant 0 : index
      %c0_41 = arith.constant 0 : index
      %48 = vector.load %arg5[%c0_39, %c0_40, %c0_41] : memref<1x2x128xf32, #tpu.memory_space<vmem>>, vector<1x2x128xf32>
      %49 = vector.shape_cast %48 : vector<1x2x128xf32> to vector<2x128xf32>
      %50 = vector.shape_cast %47 : vector<2x128xf32> to vector<1x2x128xf32>
      tpu.vector_store %arg5[%c0_39, %c0_40, %c0_41], %50 {strides = array<i32>} : memref<1x2x128xf32, #tpu.memory_space<vmem>>, vector<1x2x128xf32>,
      %c0_42 = arith.constant 0 : index
      %c0_43 = arith.constant 0 : index
      %51 = vector.load %arg10[%c0_42, %c0_43] : memref<2x128xf32, #tpu.memory_space<vmem>>, vector<2x128xf32>
      %c0_44 = arith.constant 0 : index
      %c0_45 = arith.constant 0 : index
      %c0_46 = arith.constant 0 : index
      %52 = vector.load %arg6[%c0_44, %c0_45, %c0_46] : memref<1x2x128xf32, #tpu.memory_space<vmem>>, vector<1x2x128xf32>
      %53 = vector.shape_cast %52 : vector<1x2x128xf32> to vector<2x128xf32>
      %54 = vector.shape_cast %51 : vector<2x128xf32> to vector<1x2x128xf32>
      tpu.vector_store %arg6[%c0_44, %c0_45, %c0_46], %54 {strides = array<i32>} : memref<1x2x128xf32, #tpu.memory_space<vmem>>, vector<1x2x128xf32>,
      %c0_47 = arith.constant 0 : index
      %c0_48 = arith.constant 0 : index
      %55 = vector.load %arg11[%c0_47, %c0_48] : memref<2x128xf32, #tpu.memory_space<vmem>>, vector<2x128xf32>
      %c0_49 = arith.constant 0 : index
      %c0_50 = arith.constant 0 : index
      %c0_51 = arith.constant 0 : index
      %56 = vector.load %arg7[%c0_49, %c0_50, %c0_51] : memref<1x2x128xf32, #tpu.memory_space<vmem>>, vector<1x2x128xf32>
      %57 = vector.shape_cast %56 : vector<1x2x128xf32> to vector<2x128xf32>
      %58 = vector.shape_cast %55 : vector<2x128xf32> to vector<1x2x128xf32>
      tpu.vector_store %arg7[%c0_49, %c0_50, %c0_51], %58 {strides = array<i32>} : memref<1x2x128xf32, #tpu.memory_space<vmem>>, vector<1x2x128xf32>,
    } else {
    }
    return
  }
  func.func @transform_0(%arg0: i32, %arg1: i32) -> (i32, i32, i32) {
    %c1_i32 = arith.constant 1 : i32
    %0 = arith.muli %arg0, %c1_i32 : i32
    %1 = arith.addi %0, %arg1 : i32
    %c0_i32 = arith.constant 0 : i32
    %c0_i32_0 = arith.constant 0 : i32
    %c0_i32_1 = arith.constant 0 : i32
    return %c0_i32, %1, %c0_i32_0 : i32, i32, i32
  }
  func.func @transform_1(%arg0: i32, %arg1: i32) -> (i32, i32, i32) {
    %c1_i32 = arith.constant 1 : i32
    %0 = arith.muli %arg0, %c1_i32 : i32
    %1 = arith.addi %0, %arg1 : i32
    %c0_i32 = arith.constant 0 : i32
    %c0_i32_0 = arith.constant 0 : i32
    %c0_i32_1 = arith.constant 0 : i32
    return %c0_i32, %1, %c0_i32_0 : i32, i32, i32
  }
  func.func @transform_2(%arg0: i32, %arg1: i32) -> (i32, i32, i32) {
    %c0_i32 = arith.constant 0 : i32
    %c0_i32_0 = arith.constant 0 : i32
    %c0_i32_1 = arith.constant 0 : i32
    return %arg0, %c0_i32, %c0_i32_0 : i32, i32, i32
  }
  func.func @transform_3(%arg0: i32, %arg1: i32) -> (i32, i32, i32) {
    %c0_i32 = arith.constant 0 : i32
    %c0_i32_0 = arith.constant 0 : i32
    %c0_i32_1 = arith.constant 0 : i32
    return %arg0, %c0_i32, %c0_i32_0 : i32, i32, i32
  }
  func.func @transform_4(%arg0: i32, %arg1: i32) -> (i32, i32, i32) {
    %c0_i32 = arith.constant 0 : i32
    %c0_i32_0 = arith.constant 0 : i32
    %c0_i32_1 = arith.constant 0 : i32
    return %arg0, %c0_i32, %c0_i32_0 : i32, i32, i32
  }
  func.func @transform_5(%arg0: i32, %arg1: i32) -> (i32, i32, i32) {
    %c0_i32 = arith.constant 0 : i32
    %c0_i32_0 = arith.constant 0 : i32
    %c0_i32_1 = arith.constant 0 : i32
    return %arg0, %c0_i32, %c0_i32_0 : i32, i32, i32
  }
}

</mosaic_0001>

<llo_original>
// kernel: bce_dice_loss.1
$region0: #{bce_dice_loss.1}
  #allocation0 [shape = 'u32[]', space=smem, size = 0x4, offset = 0x4, fixed_abs, tag = 'smem constant byte address 0x4 - core index']
  #allocation1 [shape = 'u32[144,128]{1,0:T(1,128)}', space=vmem, size = 0x12000, scoped, tag = 'internal scratch']
  #allocation2 [shape = 'f32[2,128]{1,0:T(2,128)}', space=vmem, size = 0x400, scoped, tag = 'scratch operand']
  #allocation3 [shape = 'f32[2,128]{1,0:T(2,128)}', space=vmem, size = 0x400, scoped, tag = 'scratch operand']
  #allocation4 [shape = 'f32[2,128]{1,0:T(2,128)}', space=vmem, size = 0x400, scoped, tag = 'scratch operand']
  #allocation5 [shape = 'f32[2,128]{1,0:T(2,128)}', space=vmem, size = 0x400, scoped, tag = 'scratch operand']
  %s0 = inlined_call_operand.vmem [shape: f32[2,64,128], index: 0, kind: input, shape index: {}]
  %s1 = inlined_call_operand.vmem [shape: f32[2,64,128], index: 1, kind: input, shape index: {}]
  %s2 = inlined_call_operand.vmem [shape: f32[2,2,128], index: 2, kind: output, shape index: {0}]
  %s3 = inlined_call_operand.vmem [shape: f32[2,2,128], index: 3, kind: output, shape index: {1}]
  %s4 = inlined_call_operand.vmem [shape: f32[2,2,128], index: 4, kind: output, shape index: {2}]
  %s5 = inlined_call_operand.vmem [shape: f32[2,2,128], index: 5, kind: output, shape index: {3}]
  %6 = xla_tuple %s2, %s3, %s4, %s5
  %s7 = sld [smem:[#allocation0]]
  $region149: #{bce_dice_loss.1} parent=0
    _
  %s9 = ssub.s32 1, %s7
  %s10 = scalar_select 0, %s9, %s7
  $region1: #{bce_dice_loss.1} parent=0
    #allocation6 [shape = 'u8[65536]{0}', space=vmem, size = 0x10000, scoped, tag = 'input window, operand 0']
    #allocation7 [shape = 'u8[65536]{0}', space=vmem, size = 0x10000, scoped, tag = 'input window, operand 1']
    loop: start=0, step=1, limit=4
    $region2: #{bce_dice_loss.1} parent=1 // loop_pre_header
      _
    $region3: #{bce_dice_loss.1} parent=1 // loop_header
      %s12 = sphi 0, %s16
      %p13 = scmp.ge.s32.totalorder %s12, 4
      %s19 = sphi 0, %s31
      %s20 = sphi 0, %s27
      %s21 = sphi 0, %s19
      %s22 = sphi 0, %s20
      %s23 = sphi 0, %s21
      %s24 = sphi 0, %s22
      %s36 = sphi 0, %s38
      %s39 = sphi 0, %s36
      %s40 = sphi 0, %s39
      %s56 = sphi 0, %s40
      %s64 = sphi 0, %s66
      %s67 = sphi 0, %s64
      %s68 = sphi 0, %s67
      %s84 = sphi 0, %s68
      %s90 = sphi 0, %s92
      %s93 = sphi 0, %s90
      %s94 = sphi 0, %s93
      %s110 = sphi 0, %s94
      %s116 = sphi 0, %s118
      %s119 = sphi 0, %s116
      %s120 = sphi 0, %s119
      %s136 = sphi 0, %s120
      %s142 = sphi 0, %s144
      %s145 = sphi 0, %s142
      %s146 = sphi 0, %s145
      %s162 = sphi 0, %s146
      %s168 = sphi 0, %s170
      %s171 = sphi 0, %s168
      %s172 = sphi 0, %s171
      %s188 = sphi 0, %s172
    $region4: #{bce_dice_loss.1} parent=1 // loop_header_branch
      %15 = sbr.rel (%p13) target = $region8
    $region5: #{bce_dice_loss.1} parent=1 // loop_body
      %s17 = ssub.s32 %s12, 1
      %s18 = ssub.s32 %s12, 2
      %s25 = sadd.s32 1, %s20
      %p26 = scmp.ge.s32.totalorder %s25, 1
      %s27 = scalar_select %p26, 0, %s25
      %s28 = sadd.s32 1, %s19
      %s29 = scalar_select %p26, %s28, %s19
      %p30 = scmp.ge.s32.totalorder %s29, 2
      %s31 = scalar_select %p30, 0, %s29
      %s32 = sadd.s32 %s19, %s20
      %s33 = sadd.s32 %s31, %s27
      %s34 = ssub.s32 %s32, %s33
      %p35 = scmp.eq.s32.totalorder %s34, 0
      %s37 = sadd.s32 %s36, 1
      %s38 = scalar_select %p35, %s36, %s37
      %p41 = pneg %p35
      %p42 = scmp.eq.s32.totalorder %s12, 1
      %p43 = por %p41, %p42
      %p44 = scmp.ne.s32.totalorder %s36, %s39
      %p45 = scmp.eq.s32.totalorder %s12, 0
      %p46 = por %p44, %p45
      %p47 = scmp.ne.s32.totalorder %s36, %s39
      %p48 = scmp.eq.s32.totalorder %s17, 1
      %p49 = por %p47, %p48
      %p50 = scmp.ne.s32.totalorder %s39, %s40
      %p51 = scmp.eq.s32.totalorder %s17, 0
      %p52 = por %p50, %p51
      %p53 = scmp.ne.s32.totalorder %s39, %s40
      %p54 = scmp.eq.s32.totalorder %s18, 1
      %p55 = por %p53, %p54
      %p57 = scmp.ne.s32.totalorder %s40, %s56
      %p58 = scmp.eq.s32.totalorder %s18, 0
      %p59 = por %p57, %p58
      %s60 = sadd.s32 %s19, %s20
      %s61 = sadd.s32 %s31, %s27
      %s62 = ssub.s32 %s60, %s61
      %p63 = scmp.eq.s32.totalorder %s62, 0
      %s65 = sadd.s32 %s64, 1
      %s66 = scalar_select %p63, %s64, %s65
      %p69 = pneg %p63
      %p70 = scmp.eq.s32.totalorder %s12, 1
      %p71 = por %p69, %p70
      %p72 = scmp.ne.s32.totalorder %s64, %s67
      %p73 = scmp.eq.s32.totalorder %s12, 0
      %p74 = por %p72, %p73
      %p75 = scmp.ne.s32.totalorder %s64, %s67
      %p76 = scmp.eq.s32.totalorder %s17, 1
      %p77 = por %p75, %p76
      %p78 = scmp.ne.s32.totalorder %s67, %s68
      %p79 = scmp.eq.s32.totalorder %s17, 0
      %p80 = por %p78, %p79
      %p81 = scmp.ne.s32.totalorder %s67, %s68
      %p82 = scmp.eq.s32.totalorder %s18, 1
      %p83 = por %p81, %p82
      %p85 = scmp.ne.s32.totalorder %s68, %s84
      %p86 = scmp.eq.s32.totalorder %s18, 0
      %p87 = por %p85, %p86
      %s88 = ssub.s32 %s19, %s31
      %p89 = scmp.eq.s32.totalorder %s88, 0
      %s91 = sadd.s32 %s90, 1
      %s92 = scalar_select %p89, %s90, %s91
      %p95 = pneg %p89
      %p96 = scmp.eq.s32.totalorder %s12, 1
      %p97 = por %p95, %p96
      %p98 = scmp.ne.s32.totalorder %s90, %s93
      %p99 = scmp.eq.s32.totalorder %s12, 0
      %p100 = por %p98, %p99
      %p101 = scmp.ne.s32.totalorder %s90, %s93
      %p102 = scmp.eq.s32.totalorder %s17, 1
      %p103 = por %p101, %p102
      %p104 = scmp.ne.s32.totalorder %s93, %s94
      %p105 = scmp.eq.s32.totalorder %s17, 0
      %p106 = por %p104, %p105
      %p107 = scmp.ne.s32.totalorder %s93, %s94
      %p108 = scmp.eq.s32.totalorder %s18, 1
      %p109 = por %p107, %p108
      %p111 = scmp.ne.s32.totalorder %s94, %s110
      %p112 = scmp.eq.s32.totalorder %s18, 0
      %p113 = por %p111, %p112
      %s114 = ssub.s32 %s19, %s31
      %p115 = scmp.eq.s32.totalorder %s114, 0
      %s117 = sadd.s32 %s116, 1
      %s118 = scalar_select %p115, %s116, %s117
      %p121 = pneg %p115
      %p122 = scmp.eq.s32.totalorder %s12, 1
      %p123 = por %p121, %p122
      %p124 = scmp.ne.s32.totalorder %s116, %s119
      %p125 = scmp.eq.s32.totalorder %s12, 0
      %p126 = por %p124, %p125
      %p127 = scmp.ne.s32.totalorder %s116, %s119
      %p128 = scmp.eq.s32.totalorder %s17, 1
      %p129 = por %p127, %p128
      %p130 = scmp.ne.s32.totalorder %s119, %s120
      %p131 = scmp.eq.s32.totalorder %s17, 0
      %p132 = por %p130, %p131
      %p133 = scmp.ne.s32.totalorder %s119, %s120
      %p134 = scmp.eq.s32.totalorder %s18, 1
      %p135 = por %p133, %p134
      %p137 = scmp.ne.s32.totalorder %s120, %s136
      %p138 = scmp.eq.s32.totalorder %s18, 0
      %p139 = por %p137, %p138
      %s140 = ssub.s32 %s19, %s31
      %p141 = scmp.eq.s32.totalorder %s140, 0
      %s143 = sadd.s32 %s142, 1
      %s144 = scalar_select %p141, %s142, %s143
      %p147 = pneg %p141
      %p148 = scmp.eq.s32.totalorder %s12, 1
      %p149 = por %p147, %p148
      %p150 = scmp.ne.s32.totalorder %s142, %s145
      %p151 = scmp.eq.s32.totalorder %s12, 0
      %p152 = por %p150, %p151
      %p153 = scmp.ne.s32.totalorder %s142, %s145
      %p154 = scmp.eq.s32.totalorder %s17, 1
      %p155 = por %p153, %p154
      %p156 = scmp.ne.s32.totalorder %s145, %s146
      %p157 = scmp.eq.s32.totalorder %s17, 0
      %p158 = por %p156, %p157
      %p159 = scmp.ne.s32.totalorder %s145, %s146
      %p160 = scmp.eq.s32.totalorder %s18, 1
      %p161 = por %p159, %p160
      %p163 = scmp.ne.s32.totalorder %s146, %s162
      %p164 = scmp.eq.s32.totalorder %s18, 0
      %p165 = por %p163, %p164
      %s166 = ssub.s32 %s19, %s31
      %p167 = scmp.eq.s32.totalorder %s166, 0
      %s169 = sadd.s32 %s168, 1
      %s170 = scalar_select %p167, %s168, %s169
      %p173 = pneg %p167
      %p174 = scmp.eq.s32.totalorder %s12, 1
      %p175 = por %p173, %p174
      %p176 = scmp.ne.s32.totalorder %s168, %s171
      %p177 = scmp.eq.s32.totalorder %s12, 0
      %p178 = por %p176, %p177
      %p179 = scmp.ne.s32.totalorder %s168, %s171
      %p180 = scmp.eq.s32.totalorder %s17, 1
      %p181 = por %p179, %p180
      %p182 = scmp.ne.s32.totalorder %s171, %s172
      %p183 = scmp.eq.s32.totalorder %s17, 0
      %p184 = por %p182, %p183
      %p185 = scmp.ne.s32.totalorder %s171, %s172
      %p186 = scmp.eq.s32.totalorder %s18, 1
      %p187 = por %p185, %p186
      %p189 = scmp.ne.s32.totalorder %s172, %s188
      %p190 = scmp.eq.s32.totalorder %s18, 0
      %p191 = por %p189, %p190
      %p192 = scmp.le.s32.totalorder 1, %s12
      %p193 = scmp.lt.s32.totalorder %s12, 3
      %p194 = pnand %p192, %p193
      %p195 = pneg %p194
      // Predicated region
      $region9: #{bce_dice_loss.1} parent=5 // pred_check
        _
      $region10: #{bce_dice_loss.1} parent=5 // pred_check_branch
        %197 = sbr.rel (%p194) target = $region12
      $region11: #{bce_dice_loss.1} parent=5 // pred_region
        %s198 = ssub.s32 %s12, 1
      $region12: #{bce_dice_loss.1} parent=5 // pred_fallthru
        _
      %p199 = scmp.lt.s32.totalorder %s12, 2
      // Predicated region
      $region13: #{bce_dice_loss.1} parent=5 // pred_check
        %p200 = pneg %p199
      $region14: #{bce_dice_loss.1} parent=5 // pred_check_branch
        %202 = sbr.rel (%p200) target = $region16
      $region15: #{bce_dice_loss.1} parent=5 // pred_region
        // Predicated region
        $region17: #{bce_dice_loss.1} parent=15 // pred_check
          %p203 = pneg %p46
        $region18: #{bce_dice_loss.1} parent=15 // pred_check_branch
          %205 = sbr.rel (%p203) target = $region20
        $region19: #{bce_dice_loss.1} parent=15 // pred_region
          %s206 = sand.u32 %s36, 1
          %s207 = sand.u32 %s36, 1
          %s208 = smul.addr %s207, 64
          %s209 = scalar_lea.vmem [#allocation6], %s208
          %s210 = sadd.s32 %s19, %s20
          %s211 = smul.u32 4, %s210
          %s212 = smul.addr %s211, 8
          %s213 = scalar_lea.vmem %s0, %s212
          // Predicated region
          $region21: #{bce_dice_loss.1} parent=19 // pred_check
            _
          $region22: #{bce_dice_loss.1} parent=19 // pred_check_branch
            %215 = sbr.rel (0) target = $region24
          $region23: #{bce_dice_loss.1} parent=19 // pred_region
            // Predicated region
            $region25: #{bce_dice_loss.1} parent=23 // pred_check
              _
            $region26: #{bce_dice_loss.1} parent=23 // pred_check_branch
              %217 = sbr.rel (0) target = $region28
            $region27: #{bce_dice_loss.1} parent=23 // pred_region
              // Predicated region
              $region40: #{bce_dice_loss.1} parent=27 // pred_check
                _
              $region41: #{bce_dice_loss.1} parent=27 // pred_check_branch
                %246 = sbr.rel (0) target = $region43
              $region42: #{bce_dice_loss.1} parent=27 // pred_region
                loop: start=0, step=1, limit=1
                $region44: #{bce_dice_loss.1} parent=42 // loop_pre_header
                  _
                $region45: #{bce_dice_loss.1} parent=42 // loop_header
                  %s248 = sphi 0, %s252
                  %p249 = scmp.ge.s32.totalorder %s248, 1
                  %s253 = sphi %s213, %s213
                  %s254 = sphi %s209, %s209
                $region46: #{bce_dice_loss.1} parent=42 // loop_header_branch
                  %251 = sbr.rel (%p249) target = $region50
                $region47: #{bce_dice_loss.1} parent=42 // loop_body
                  %v255 = vld [vmem:[%s253] sm:$0xff]
                  %256 = vst [vmem:[%s254] sm:$0xff] %v255
                  %v257 = vld [vmem:[%s253 + $0x8] sm:$0xff]
                  %258 = vst [vmem:[%s254 + $0x8] sm:$0xff] %v257
                  %v259 = vld [vmem:[%s253 + $0x10] sm:$0xff]
                  %260 = vst [vmem:[%s254 + $0x10] sm:$0xff] %v259
                  %v261 = vld [vmem:[%s253 + $0x18] sm:$0xff]
                  %262 = vst [vmem:[%s254 + $0x18] sm:$0xff] %v261
                  %v263 = vld [vmem:[%s253 + $0x40] sm:$0xff]
                  %264 = vst [vmem:[%s254 + $0x20] sm:$0xff] %v263
                  %v265 = vld [vmem:[%s253 + $0x48] sm:$0xff]
                  %266 = vst [vmem:[%s254 + $0x28] sm:$0xff] %v265
                  %v267 = vld [vmem:[%s253 + $0x50] sm:$0xff]
                  %268 = vst [vmem:[%s254 + $0x30] sm:$0xff] %v267
                  %v269 = vld [vmem:[%s253 + $0x58] sm:$0xff]
                  %270 = vst [vmem:[%s254 + $0x38] sm:$0xff] %v269
                $region48: #{bce_dice_loss.1} parent=42 // loop_footer
                  %s252 = sadd.s32 1, %s248
                $region49: #{bce_dice_loss.1} parent=42 // loop_footer_branch
                  %247 = sbr.rel target = $region45
                $region50: #{bce_dice_loss.1} parent=42 // loop_exit
                  _
              $region43: #{bce_dice_loss.1} parent=27 // pred_fallthru
                _
              // Predicated region
              $region51: #{bce_dice_loss.1} parent=27 // pred_check
                _
              $region52: #{bce_dice_loss.1} parent=27 // pred_check_branch
                %272 = sbr.rel target = $region54
              $region53: #{bce_dice_loss.1} parent=27 // pred_region
                _
              $region54: #{bce_dice_loss.1} parent=27 // pred_fallthru
                _
            $region28: #{bce_dice_loss.1} parent=23 // pred_fallthru
              _
            // Predicated region
            $region29: #{bce_dice_loss.1} parent=23 // pred_check
              _
            $region30: #{bce_dice_loss.1} parent=23 // pred_check_branch
              %219 = sbr.rel target = $region32
            $region31: #{bce_dice_loss.1} parent=23 // pred_region
              loop: start=0, step=1, limit=1
              $region33: #{bce_dice_loss.1} parent=31 // loop_pre_header
                _
              $region34: #{bce_dice_loss.1} parent=31 // loop_header
                %s222 = sphi 0, %s226
                %p223 = scmp.ge.s32.totalorder %s222, 1
                %s227 = sphi %s213, %s213
                %s228 = sphi %s209, %s209
              $region35: #{bce_dice_loss.1} parent=31 // loop_header_branch
                %225 = sbr.rel (%p223) target = $region39
              $region36: #{bce_dice_loss.1} parent=31 // loop_body
                %v229 = vld [vmem:[%s227] sm:$0xff]
                %230 = vst [vmem:[%s228] sm:$0xff] %v229
                %v231 = vld [vmem:[%s227 + $0x8] sm:$0xff]
                %232 = vst [vmem:[%s228 + $0x8] sm:$0xff] %v231
                %v233 = vld [vmem:[%s227 + $0x10] sm:$0xff]
                %234 = vst [vmem:[%s228 + $0x10] sm:$0xff] %v233
                %v235 = vld [vmem:[%s227 + $0x18] sm:$0xff]
                %236 = vst [vmem:[%s228 + $0x18] sm:$0xff] %v235
                %v237 = vld [vmem:[%s227 + $0x40] sm:$0xff]
                %238 = vst [vmem:[%s228 + $0x20] sm:$0xff] %v237
                %v239 = vld [vmem:[%s227 + $0x48] sm:$0xff]
                %240 = vst [vmem:[%s228 + $0x28] sm:$0xff] %v239
                %v241 = vld [vmem:[%s227 + $0x50] sm:$0xff]
                %242 = vst [vmem:[%s228 + $0x30] sm:$0xff] %v241
                %v243 = vld [vmem:[%s227 + $0x58] sm:$0xff]
                %244 = vst [vmem:[%s228 + $0x38] sm:$0xff] %v243
              $region37: #{bce_dice_loss.1} parent=31 // loop_footer
                %s226 = sadd.s32 1, %s222
              $region38: #{bce_dice_loss.1} parent=31 // loop_footer_branch
                %221 = sbr.rel target = $region34
              $region39: #{bce_dice_loss.1} parent=31 // loop_exit
                _
            $region32: #{bce_dice_loss.1} parent=23 // pred_fallthru
              _
          $region24: #{bce_dice_loss.1} parent=19 // pred_fallthru
            _
          %273 = vnop
        $region20: #{bce_dice_loss.1} parent=15 // pred_fallthru
          _
        // Predicated region
        $region55: #{bce_dice_loss.1} parent=15 // pred_check
          %p274 = pneg %p74
        $region56: #{bce_dice_loss.1} parent=15 // pred_check_branch
          %276 = sbr.rel (%p274) target = $region58
        $region57: #{bce_dice_loss.1} parent=15 // pred_region
          %s277 = sand.u32 %s64, 1
          %s278 = sand.u32 %s64, 1
          %s279 = smul.addr %s278, 64
          %s280 = scalar_lea.vmem [#allocation7], %s279
          %s281 = sadd.s32 %s19, %s20
          %s282 = smul.u32 4, %s281
          %s283 = smul.addr %s282, 8
          %s284 = scalar_lea.vmem %s1, %s283
          // Predicated region
          $region59: #{bce_dice_loss.1} parent=57 // pred_check
            _
          $region60: #{bce_dice_loss.1} parent=57 // pred_check_branch
            %286 = sbr.rel (0) target = $region62
          $region61: #{bce_dice_loss.1} parent=57 // pred_region
            // Predicated region
            $region63: #{bce_dice_loss.1} parent=61 // pred_check
              _
            $region64: #{bce_dice_loss.1} parent=61 // pred_check_branch
              %288 = sbr.rel (0) target = $region66
            $region65: #{bce_dice_loss.1} parent=61 // pred_region
              // Predicated region
              $region78: #{bce_dice_loss.1} parent=65 // pred_check
                _
              $region79: #{bce_dice_loss.1} parent=65 // pred_check_branch
                %317 = sbr.rel (0) target = $region81
              $region80: #{bce_dice_loss.1} parent=65 // pred_region
                loop: start=0, step=1, limit=1
                $region82: #{bce_dice_loss.1} parent=80 // loop_pre_header
                  _
                $region83: #{bce_dice_loss.1} parent=80 // loop_header
                  %s319 = sphi 0, %s323
                  %p320 = scmp.ge.s32.totalorder %s319, 1
                  %s324 = sphi %s284, %s284
                  %s325 = sphi %s280, %s280
                $region84: #{bce_dice_loss.1} parent=80 // loop_header_branch
                  %322 = sbr.rel (%p320) target = $region88
                $region85: #{bce_dice_loss.1} parent=80 // loop_body
                  %v326 = vld [vmem:[%s324] sm:$0xff]
                  %327 = vst [vmem:[%s325] sm:$0xff] %v326
                  %v328 = vld [vmem:[%s324 + $0x8] sm:$0xff]
                  %329 = vst [vmem:[%s325 + $0x8] sm:$0xff] %v328
                  %v330 = vld [vmem:[%s324 + $0x10] sm:$0xff]
                  %331 = vst [vmem:[%s325 + $0x10] sm:$0xff] %v330
                  %v332 = vld [vmem:[%s324 + $0x18] sm:$0xff]
                  %333 = vst [vmem:[%s325 + $0x18] sm:$0xff] %v332
                  %v334 = vld [vmem:[%s324 + $0x40] sm:$0xff]
                  %335 = vst [vmem:[%s325 + $0x20] sm:$0xff] %v334
                  %v336 = vld [vmem:[%s324 + $0x48] sm:$0xff]
                  %337 = vst [vmem:[%s325 + $0x28] sm:$0xff] %v336
                  %v338 = vld [vmem:[%s324 + $0x50] sm:$0xff]
                  %339 = vst [vmem:[%s325 + $0x30] sm:$0xff] %v338
                  %v340 = vld [vmem:[%s324 + $0x58] sm:$0xff]
                  %341 = vst [vmem:[%s325 + $0x38] sm:$0xff] %v340
                $region86: #{bce_dice_loss.1} parent=80 // loop_footer
                  %s323 = sadd.s32 1, %s319
                $region87: #{bce_dice_loss.1} parent=80 // loop_footer_branch
                  %318 = sbr.rel target = $region83
                $region88: #{bce_dice_loss.1} parent=80 // loop_exit
                  _
              $region81: #{bce_dice_loss.1} parent=65 // pred_fallthru
                _
              // Predicated region
              $region89: #{bce_dice_loss.1} parent=65 // pred_check
                _
              $region90: #{bce_dice_loss.1} parent=65 // pred_check_branch
                %343 = sbr.rel target = $region92
              $region91: #{bce_dice_loss.1} parent=65 // pred_region
                _
              $region92: #{bce_dice_loss.1} parent=65 // pred_fallthru
                _
            $region66: #{bce_dice_loss.1} parent=61 // pred_fallthru
              _
            // Predicated region
            $region67: #{bce_dice_loss.1} parent=61 // pred_check
              _
            $region68: #{bce_dice_loss.1} parent=61 // pred_check_branch
              %290 = sbr.rel target = $region70
            $region69: #{bce_dice_loss.1} parent=61 // pred_region
              loop: start=0, step=1, limit=1
              $region71: #{bce_dice_loss.1} parent=69 // loop_pre_header
                _
              $region72: #{bce_dice_loss.1} parent=69 // loop_header
                %s293 = sphi 0, %s297
                %p294 = scmp.ge.s32.totalorder %s293, 1
                %s298 = sphi %s284, %s284
                %s299 = sphi %s280, %s280
              $region73: #{bce_dice_loss.1} parent=69 // loop_header_branch
                %296 = sbr.rel (%p294) target = $region77
              $region74: #{bce_dice_loss.1} parent=69 // loop_body
                %v300 = vld [vmem:[%s298] sm:$0xff]
                %301 = vst [vmem:[%s299] sm:$0xff] %v300
                %v302 = vld [vmem:[%s298 + $0x8] sm:$0xff]
                %303 = vst [vmem:[%s299 + $0x8] sm:$0xff] %v302
                %v304 = vld [vmem:[%s298 + $0x10] sm:$0xff]
                %305 = vst [vmem:[%s299 + $0x10] sm:$0xff] %v304
                %v306 = vld [vmem:[%s298 + $0x18] sm:$0xff]
                %307 = vst [vmem:[%s299 + $0x18] sm:$0xff] %v306
                %v308 = vld [vmem:[%s298 + $0x40] sm:$0xff]
                %309 = vst [vmem:[%s299 + $0x20] sm:$0xff] %v308
                %v310 = vld [vmem:[%s298 + $0x48] sm:$0xff]
                %311 = vst [vmem:[%s299 + $0x28] sm:$0xff] %v310
                %v312 = vld [vmem:[%s298 + $0x50] sm:$0xff]
                %313 = vst [vmem:[%s299 + $0x30] sm:$0xff] %v312
                %v314 = vld [vmem:[%s298 + $0x58] sm:$0xff]
                %315 = vst [vmem:[%s299 + $0x38] sm:$0xff] %v314
              $region75: #{bce_dice_loss.1} parent=69 // loop_footer
                %s297 = sadd.s32 1, %s293
              $region76: #{bce_dice_loss.1} parent=69 // loop_footer_branch
                %292 = sbr.rel target = $region72
              $region77: #{bce_dice_loss.1} parent=69 // loop_exit
                _
            $region70: #{bce_dice_loss.1} parent=61 // pred_fallthru
              _
          $region62: #{bce_dice_loss.1} parent=57 // pred_fallthru
            _
          %344 = vnop
        $region58: #{bce_dice_loss.1} parent=15 // pred_fallthru
          _
      $region16: #{bce_dice_loss.1} parent=5 // pred_fallthru
        _
      %p345 = scmp.le.s32.totalorder 1, %s12
      %p346 = scmp.lt.s32.totalorder %s12, 3
      %p347 = pnand %p345, %p346
      %p348 = pneg %p347
      // Predicated region
      $region93: #{bce_dice_loss.1} parent=5 // pred_check
        _
      $region94: #{bce_dice_loss.1} parent=5 // pred_check_branch
        %350 = sbr.rel (%p347) target = $region96
      $region95: #{bce_dice_loss.1} parent=5 // pred_region
        %s351 = ssub.s32 %s12, 1
        %s352 = sand.u32 %s39, 1
        %s353 = sand.u32 %s39, 1
        %s354 = smul.addr %s353, 64
        %s355 = scalar_lea.vmem [#allocation6], %s354
        // Predicated region
        $region97: #{bce_dice_loss.1} parent=95 // pred_check
          %p356 = pneg %p52
        $region98: #{bce_dice_loss.1} parent=95 // pred_check_branch
          %358 = sbr.rel (%p356) target = $region100
        $region99: #{bce_dice_loss.1} parent=95 // pred_region
          _
        $region100: #{bce_dice_loss.1} parent=95 // pred_fallthru
          _
        %s359 = sand.u32 %s67, 1
        %s360 = sand.u32 %s67, 1
        %s361 = smul.addr %s360, 64
        %s362 = scalar_lea.vmem [#allocation7], %s361
        // Predicated region
        $region101: #{bce_dice_loss.1} parent=95 // pred_check
          %p363 = pneg %p80
        $region102: #{bce_dice_loss.1} parent=95 // pred_check_branch
          %365 = sbr.rel (%p363) target = $region104
        $region103: #{bce_dice_loss.1} parent=95 // pred_region
          _
        $region104: #{bce_dice_loss.1} parent=95 // pred_fallthru
          _
        %s366 = sand.u32 %s39, 1
        %s367 = sand.u32 %s39, 1
        %s368 = smul.addr %s367, 64
        %s369 = scalar_lea.vmem [#allocation6], %s368
        %p370 = pneg %p52
        %p371 = pneg %p49
        %s372 = sand.u32 %s67, 1
        %s373 = sand.u32 %s67, 1
        %s374 = smul.addr %s373, 64
        %s375 = scalar_lea.vmem [#allocation7], %s374
        %p376 = pneg %p80
        %p377 = pneg %p77
        %p378 = pneg %p106
        %p379 = pneg %p103
        %p380 = scmp.lt.s32.totalorder %s21, 1
        %s381 = scalar_select %p380, %s21, 1
        %s382 = smul.addr %s381, 2
        %s383 = scalar_lea.vmem %s2, %s382
        %p384 = pneg %p132
        %p385 = pneg %p129
        %p386 = scmp.lt.s32.totalorder %s21, 1
        %s387 = scalar_select %p386, %s21, 1
        %s388 = smul.addr %s387, 2
        %s389 = scalar_lea.vmem %s3, %s388
        %p390 = pneg %p158
        %p391 = pneg %p155
        %p392 = scmp.lt.s32.totalorder %s21, 1
        %s393 = scalar_select %p392, %s21, 1
        %s394 = smul.addr %s393, 2
        %s395 = scalar_lea.vmem %s4, %s394
        %p396 = pneg %p184
        %p397 = pneg %p181
        %p398 = scmp.lt.s32.totalorder %s21, 1
        %s399 = scalar_select %p398, %s21, 1
        %s400 = smul.addr %s399, 2
        %s401 = scalar_lea.vmem %s5, %s400
        %s402 = sadd.s32 %s21, %s22
        %s403 = smul.u32 4, %s402
        %s404 = sadd.s32 %s21, %s22
        %s405 = smul.u32 4, %s404
        %p406 = scmp.lt.s32.totalorder %s21, 1
        %s407 = scalar_select %p406, %s21, 1
        %s408 = smul.addr %s407, 2
        %s409 = scalar_lea.vmem %s2, %s408
        %p410 = scmp.lt.s32.totalorder %s21, 1
        %s411 = scalar_select %p410, %s21, 1
        %s412 = smul.addr %s411, 2
        %s413 = scalar_lea.vmem %s3, %s412
        %p414 = scmp.lt.s32.totalorder %s21, 1
        %s415 = scalar_select %p414, %s21, 1
        %s416 = smul.addr %s415, 2
        %s417 = scalar_lea.vmem %s4, %s416
        %p418 = scmp.lt.s32.totalorder %s21, 1
        %s419 = scalar_select %p418, %s21, 1
        %s420 = smul.addr %s419, 2
        %s421 = scalar_lea.vmem %s5, %s420
        %p422 = scmp.eq.s32.totalorder %s22, 0
        // Predicated region
        $region105: #{bce_dice_loss.1} parent=95 // pred_check
          %p423 = pneg %p422
        $region106: #{bce_dice_loss.1} parent=95 // pred_check_branch
          %425 = sbr.rel (%p423) target = $region108
        $region107: #{bce_dice_loss.1} parent=95 // pred_region
          %426 = vst [vmem:[#allocation2] sm:$0x3] 0.0
          %427 = vst [vmem:[#allocation3] sm:$0x3] 0.0
          %428 = vst [vmem:[#allocation4] sm:$0x3] 0.0
          %429 = vst [vmem:[#allocation5] sm:$0x3] 0.0
        $region108: #{bce_dice_loss.1} parent=95 // pred_fallthru
          _
        %v430 = vld [vmem:[%s355] sm:$0xff]
        %v431 = vld [vmem:[%s355 + $0x8] sm:$0xff]
        %v432 = vld [vmem:[%s355 + $0x10] sm:$0xff]
        %v433 = vld [vmem:[%s355 + $0x18] sm:$0xff]
        %v434 = vld [vmem:[%s355 + $0x20] sm:$0xff]
        %v435 = vld [vmem:[%s355 + $0x28] sm:$0xff]
        %v436 = vld [vmem:[%s355 + $0x30] sm:$0xff]
        %v437 = vld [vmem:[%s355 + $0x38] sm:$0xff]
        %v438 = vld [vmem:[%s362] sm:$0xff]
        %v439 = vld [vmem:[%s362 + $0x8] sm:$0xff]
        %v440 = vld [vmem:[%s362 + $0x10] sm:$0xff]
        %v441 = vld [vmem:[%s362 + $0x18] sm:$0xff]
        %v442 = vld [vmem:[%s362 + $0x20] sm:$0xff]
        %v443 = vld [vmem:[%s362 + $0x28] sm:$0xff]
        %v444 = vld [vmem:[%s362 + $0x30] sm:$0xff]
        %v445 = vld [vmem:[%s362 + $0x38] sm:$0xff]
        %v446 = vand.u32 2147483647, %v430
        %v447 = vand.u32 2147483647, %v431
        %v448 = vand.u32 2147483647, %v432
        %v449 = vand.u32 2147483647, %v433
        %v450 = vand.u32 2147483647, %v434
        %v451 = vand.u32 2147483647, %v435
        %v452 = vand.u32 2147483647, %v436
        %v453 = vand.u32 2147483647, %v437
        %v454 = vsub.f32 0.0, %v446
        %v455 = vsub.f32 0.0, %v447
        %v456 = vsub.f32 0.0, %v448
        %v457 = vsub.f32 0.0, %v449
        %v458 = vsub.f32 0.0, %v450
        %v459 = vsub.f32 0.0, %v451
        %v460 = vsub.f32 0.0, %v452
        %v461 = vsub.f32 0.0, %v453
        %v462 = vmul.f32 %v454, 1.442695
        %v463 = vpow.pop %v462
        %v464 = vmul.f32 %v455, 1.442695
        %v465 = vpow.pop %v464
        %v466 = vmul.f32 %v456, 1.442695
        %v467 = vpow.pop %v466
        %v468 = vmul.f32 %v457, 1.442695
        %v469 = vpow.pop %v468
        %v470 = vmul.f32 %v458, 1.442695
        %v471 = vpow.pop %v470
        %v472 = vmul.f32 %v459, 1.442695
        %v473 = vpow.pop %v472
        %v474 = vmul.f32 %v460, 1.442695
        %v475 = vpow.pop %v474
        %v476 = vmul.f32 %v461, 1.442695
        %v477 = vpow.pop %v476
        %v478 = vmax.f32 %v430, 0.0
        %v479 = vmax.f32 %v431, 0.0
        %v480 = vmax.f32 %v432, 0.0
        %v481 = vmax.f32 %v433, 0.0
        %v482 = vmax.f32 %v434, 0.0
        %v483 = vmax.f32 %v435, 0.0
        %v484 = vmax.f32 %v436, 0.0
        %v485 = vmax.f32 %v437, 0.0
        %v486 = vmul.f32 %v430, %v438
        %v487 = vmul.f32 %v431, %v439
        %v488 = vmul.f32 %v432, %v440
        %v489 = vmul.f32 %v433, %v441
        %v490 = vmul.f32 %v434, %v442
        %v491 = vmul.f32 %v435, %v443
        %v492 = vmul.f32 %v436, %v444
        %v493 = vmul.f32 %v437, %v445
        %v494 = vsub.f32 %v478, %v486
        %v495 = vsub.f32 %v479, %v487
        %v496 = vsub.f32 %v480, %v488
        %v497 = vsub.f32 %v481, %v489
        %v498 = vsub.f32 %v482, %v490
        %v499 = vsub.f32 %v483, %v491
        %v500 = vsub.f32 %v484, %v492
        %v501 = vsub.f32 %v485, %v493
        %v502 = vadd.f32 %v463, 1.0
        %v503 = vlog2.pop %v502
        %v504 = vmul.f32 %v503, 0.6931472
        %v505 = vmul.f32 -0.5, %v463
        %v506 = vadd.f32 %v505, 1.0
        %v507 = vmul.f32 %v506, %v463
        %v508 = vand.u32 2147483647, %v463
        %vm509 = vcmp.lt.f32.partialorder %v508, 0.0004427343
        %v510 = vsel %vm509, %v507, %v504
        %v511 = vadd.f32 %v465, 1.0
        %v512 = vlog2.pop %v511
        %v513 = vmul.f32 %v512, 0.6931472
        %v514 = vmul.f32 -0.5, %v465
        %v515 = vadd.f32 %v514, 1.0
        %v516 = vmul.f32 %v515, %v465
        %v517 = vand.u32 2147483647, %v465
        %vm518 = vcmp.lt.f32.partialorder %v517, 0.0004427343
        %v519 = vsel %vm518, %v516, %v513
        %v520 = vadd.f32 %v467, 1.0
        %v521 = vlog2.pop %v520
        %v522 = vmul.f32 %v521, 0.6931472
        %v523 = vmul.f32 -0.5, %v467
        %v524 = vadd.f32 %v523, 1.0
        %v525 = vmul.f32 %v524, %v467
        %v526 = vand.u32 2147483647, %v467
        %vm527 = vcmp.lt.f32.partialorder %v526, 0.0004427343
        %v528 = vsel %vm527, %v525, %v522
        %v529 = vadd.f32 %v469, 1.0
        %v530 = vlog2.pop %v529
        %v531 = vmul.f32 %v530, 0.6931472
        %v532 = vmul.f32 -0.5, %v469
        %v533 = vadd.f32 %v532, 1.0
        %v534 = vmul.f32 %v533, %v469
        %v535 = vand.u32 2147483647, %v469
        %vm536 = vcmp.lt.f32.partialorder %v535, 0.0004427343
        %v537 = vsel %vm536, %v534, %v531
        %v538 = vadd.f32 %v471, 1.0
        %v539 = vlog2.pop %v538
        %v540 = vmul.f32 %v539, 0.6931472
        %v541 = vmul.f32 -0.5, %v471
        %v542 = vadd.f32 %v541, 1.0
        %v543 = vmul.f32 %v542, %v471
        %v544 = vand.u32 2147483647, %v471
        %vm545 = vcmp.lt.f32.partialorder %v544, 0.0004427343
        %v546 = vsel %vm545, %v543, %v540
        %v547 = vadd.f32 %v473, 1.0
        %v548 = vlog2.pop %v547
        %v549 = vmul.f32 %v548, 0.6931472
        %v550 = vmul.f32 -0.5, %v473
        %v551 = vadd.f32 %v550, 1.0
        %v552 = vmul.f32 %v551, %v473
        %v553 = vand.u32 2147483647, %v473
        %vm554 = vcmp.lt.f32.partialorder %v553, 0.0004427343
        %v555 = vsel %vm554, %v552, %v549
        %v556 = vadd.f32 %v475, 1.0
        %v557 = vlog2.pop %v556
        %v558 = vmul.f32 %v557, 0.6931472
        %v559 = vmul.f32 -0.5, %v475
        %v560 = vadd.f32 %v559, 1.0
        %v561 = vmul.f32 %v560, %v475
        %v562 = vand.u32 2147483647, %v475
        %vm563 = vcmp.lt.f32.partialorder %v562, 0.0004427343
        %v564 = vsel %vm563, %v561, %v558
        %v565 = vadd.f32 %v477, 1.0
        %v566 = vlog2.pop %v565
        %v567 = vmul.f32 %v566, 0.6931472
        %v568 = vmul.f32 -0.5, %v477
        %v569 = vadd.f32 %v568, 1.0
        %v570 = vmul.f32 %v569, %v477
        %v571 = vand.u32 2147483647, %v477
        %vm572 = vcmp.lt.f32.partialorder %v571, 0.0004427343
        %v573 = vsel %vm572, %v570, %v567
        %v574 = vadd.f32 %v494, %v510
        %v575 = vadd.f32 %v495, %v519
        %v576 = vadd.f32 %v496, %v528
        %v577 = vadd.f32 %v497, %v537
        %v578 = vadd.f32 %v498, %v546
        %v579 = vadd.f32 %v499, %v555
        %v580 = vadd.f32 %v500, %v564
        %v581 = vadd.f32 %v501, %v573
        %v582 = vadd.f32 %v463, 1.0
        %v583 = vadd.f32 %v465, 1.0
        %v584 = vadd.f32 %v467, 1.0
        %v585 = vadd.f32 %v469, 1.0
        %v586 = vadd.f32 %v471, 1.0
        %v587 = vadd.f32 %v473, 1.0
        %v588 = vadd.f32 %v475, 1.0
        %v589 = vadd.f32 %v477, 1.0
        %v590 = vrcp.pop %v582
        %v591 = vmul.f32 1.0, %v590
        %v592 = vrcp.pop %v583
        %v593 = vmul.f32 1.0, %v592
        %v594 = vrcp.pop %v584
        %v595 = vmul.f32 1.0, %v594
        %v596 = vrcp.pop %v585
        %v597 = vmul.f32 1.0, %v596
        %v598 = vrcp.pop %v586
        %v599 = vmul.f32 1.0, %v598
        %v600 = vrcp.pop %v587
        %v601 = vmul.f32 1.0, %v600
        %v602 = vrcp.pop %v588
        %v603 = vmul.f32 1.0, %v602
        %v604 = vrcp.pop %v589
        %v605 = vmul.f32 1.0, %v604
        %vm606 = vcmp.ge.f32.partialorder %v430, 0.0
        %vm607 = vcmp.ge.f32.partialorder %v431, 0.0
        %vm608 = vcmp.ge.f32.partialorder %v432, 0.0
        %vm609 = vcmp.ge.f32.partialorder %v433, 0.0
        %vm610 = vcmp.ge.f32.partialorder %v434, 0.0
        %vm611 = vcmp.ge.f32.partialorder %v435, 0.0
        %vm612 = vcmp.ge.f32.partialorder %v436, 0.0
        %vm613 = vcmp.ge.f32.partialorder %v437, 0.0
        %v614 = vmul.f32 %v463, %v591
        %v615 = vmul.f32 %v465, %v593
        %v616 = vmul.f32 %v467, %v595
        %v617 = vmul.f32 %v469, %v597
        %v618 = vmul.f32 %v471, %v599
        %v619 = vmul.f32 %v473, %v601
        %v620 = vmul.f32 %v475, %v603
        %v621 = vmul.f32 %v477, %v605
        %v622 = vsel %vm606, %v591, %v614
        %v623 = vsel %vm607, %v593, %v615
        %v624 = vsel %vm608, %v595, %v616
        %v625 = vsel %vm609, %v597, %v617
        %v626 = vsel %vm610, %v599, %v618
        %v627 = vsel %vm611, %v601, %v619
        %v628 = vsel %vm612, %v603, %v620
        %v629 = vsel %vm613, %v605, %v621
        %v630 = vld [vmem:[#allocation2] sm:$0x3]
        %v631 = vadd.f32 %v574, %v575
        %v632 = vadd.f32 %v631, %v576
        %v633 = vadd.f32 %v632, %v577
        %v634 = vrot.slane %v633, 4
        %v635 = vadd.f32 %v633, %v634
        %v636 = vrot.slane %v635, 2
        %v637 = vadd.f32 %v635, %v636
        %v638 = vrot.slane %v637, 1
        %v639 = vadd.f32 %v637, %v638
        %v640 = vadd.f32 %v578, %v579
        %v641 = vadd.f32 %v640, %v580
        %v642 = vadd.f32 %v641, %v581
        %v643 = vrot.slane %v642, 4
        %v644 = vadd.f32 %v642, %v643
        %v645 = vrot.slane %v644, 2
        %v646 = vadd.f32 %v644, %v645
        %v647 = vrot.slane %v646, 1
        %v648 = vadd.f32 %v646, %v647
        %vm651 = vcmask 1041409
        %v652 = vsel %vm651, %v648, %v639
        %v654 = vadd.f32 %v630, %v652
        %655 = vst [vmem:[#allocation2] sm:$0x3] %v654
        %v656 = vld [vmem:[#allocation3] sm:$0x3]
        %v657 = vadd.f32 %v622, %v623
        %v658 = vadd.f32 %v657, %v624
        %v659 = vadd.f32 %v658, %v625
        %v660 = vrot.slane %v659, 4
        %v661 = vadd.f32 %v659, %v660
        %v662 = vrot.slane %v661, 2
        %v663 = vadd.f32 %v661, %v662
        %v664 = vrot.slane %v663, 1
        %v665 = vadd.f32 %v663, %v664
        %v666 = vadd.f32 %v626, %v627
        %v667 = vadd.f32 %v666, %v628
        %v668 = vadd.f32 %v667, %v629
        %v669 = vrot.slane %v668, 4
        %v670 = vadd.f32 %v668, %v669
        %v671 = vrot.slane %v670, 2
        %v672 = vadd.f32 %v670, %v671
        %v673 = vrot.slane %v672, 1
        %v674 = vadd.f32 %v672, %v673
        %v677 = vsel %vm651, %v674, %v665
        %v679 = vadd.f32 %v656, %v677
        %680 = vst [vmem:[#allocation3] sm:$0x3] %v679
        %v681 = vld [vmem:[#allocation4] sm:$0x3]
        %v682 = vadd.f32 %v438, %v439
        %v683 = vadd.f32 %v682, %v440
        %v684 = vadd.f32 %v683, %v441
        %v685 = vrot.slane %v684, 4
        %v686 = vadd.f32 %v684, %v685
        %v687 = vrot.slane %v686, 2
        %v688 = vadd.f32 %v686, %v687
        %v689 = vrot.slane %v688, 1
        %v690 = vadd.f32 %v688, %v689
        %v691 = vadd.f32 %v442, %v443
        %v692 = vadd.f32 %v691, %v444
        %v693 = vadd.f32 %v692, %v445
        %v694 = vrot.slane %v693, 4
        %v695 = vadd.f32 %v693, %v694
        %v696 = vrot.slane %v695, 2
        %v697 = vadd.f32 %v695, %v696
        %v698 = vrot.slane %v697, 1
        %v699 = vadd.f32 %v697, %v698
        %v702 = vsel %vm651, %v699, %v690
        %v704 = vadd.f32 %v681, %v702
        %705 = vst [vmem:[#allocation4] sm:$0x3] %v704
        %v706 = vld [vmem:[#allocation5] sm:$0x3]
        %v707 = vmul.f32 %v622, %v438
        %v708 = vmul.f32 %v623, %v439
        %v709 = vmul.f32 %v624, %v440
        %v710 = vmul.f32 %v625, %v441
        %v711 = vmul.f32 %v626, %v442
        %v712 = vmul.f32 %v627, %v443
        %v713 = vmul.f32 %v628, %v444
        %v714 = vmul.f32 %v629, %v445
        %v715 = vadd.f32 %v707, %v708
        %v716 = vadd.f32 %v715, %v709
        %v717 = vadd.f32 %v716, %v710
        %v718 = vrot.slane %v717, 4
        %v719 = vadd.f32 %v717, %v718
        %v720 = vrot.slane %v719, 2
        %v721 = vadd.f32 %v719, %v720
        %v722 = vrot.slane %v721, 1
        %v723 = vadd.f32 %v721, %v722
        %v724 = vadd.f32 %v711, %v712
        %v725 = vadd.f32 %v724, %v713
        %v726 = vadd.f32 %v725, %v714
        %v727 = vrot.slane %v726, 4
        %v728 = vadd.f32 %v726, %v727
        %v729 = vrot.slane %v728, 2
        %v730 = vadd.f32 %v728, %v729
        %v731 = vrot.slane %v730, 1
        %v732 = vadd.f32 %v730, %v731
        %v735 = vsel %vm651, %v732, %v723
        %v737 = vadd.f32 %v706, %v735
        %738 = vst [vmem:[#allocation5] sm:$0x3] %v737
        // Predicated region
        $region109: #{bce_dice_loss.1} parent=95 // pred_check
          %p739 = pneg %p422
        $region110: #{bce_dice_loss.1} parent=95 // pred_check_branch
          %741 = sbr.rel (%p739) target = $region112
        $region111: #{bce_dice_loss.1} parent=95 // pred_region
          %v742 = vld [vmem:[#allocation2] sm:$0x3]
          %743 = vst [vmem:[%s409] sm:$0x3] %v742
          %v744 = vld [vmem:[#allocation3] sm:$0x3]
          %745 = vst [vmem:[%s413] sm:$0x3] %v744
          %v746 = vld [vmem:[#allocation4] sm:$0x3]
          %747 = vst [vmem:[%s417] sm:$0x3] %v746
          %v748 = vld [vmem:[#allocation5] sm:$0x3]
          %749 = vst [vmem:[%s421] sm:$0x3] %v748
        $region112: #{bce_dice_loss.1} parent=95 // pred_fallthru
          _
        %p750 = scmp.lt.s32.totalorder %s21, 1
        %s751 = scalar_select %p750, %s21, 1
        %s752 = smul.addr %s751, 2
        %s753 = scalar_lea.vmem %s2, %s752
        %p754 = scmp.lt.s32.totalorder %s21, 1
        %s755 = scalar_select %p754, %s21, 1
        %s756 = smul.addr %s755, 2
        %s757 = scalar_lea.vmem %s3, %s756
        %p758 = scmp.lt.s32.totalorder %s21, 1
        %s759 = scalar_select %p758, %s21, 1
        %s760 = smul.addr %s759, 2
        %s761 = scalar_lea.vmem %s4, %s760
        %p762 = scmp.lt.s32.totalorder %s21, 1
        %s763 = scalar_select %p762, %s21, 1
        %s764 = smul.addr %s763, 2
        %s765 = scalar_lea.vmem %s5, %s764
        // Predicated region
        $region113: #{bce_dice_loss.1} parent=95 // pred_check
          %p766 = pneg %p103
        $region114: #{bce_dice_loss.1} parent=95 // pred_check_branch
          %768 = sbr.rel (%p766) target = $region116
        $region115: #{bce_dice_loss.1} parent=95 // pred_region
          _
        $region116: #{bce_dice_loss.1} parent=95 // pred_fallthru
          _
        // Predicated region
        $region117: #{bce_dice_loss.1} parent=95 // pred_check
          %p769 = pneg %p129
        $region118: #{bce_dice_loss.1} parent=95 // pred_check_branch
          %771 = sbr.rel (%p769) target = $region120
        $region119: #{bce_dice_loss.1} parent=95 // pred_region
          _
        $region120: #{bce_dice_loss.1} parent=95 // pred_fallthru
          _
        // Predicated region
        $region121: #{bce_dice_loss.1} parent=95 // pred_check
          %p772 = pneg %p155
        $region122: #{bce_dice_loss.1} parent=95 // pred_check_branch
          %774 = sbr.rel (%p772) target = $region124
        $region123: #{bce_dice_loss.1} parent=95 // pred_region
          _
        $region124: #{bce_dice_loss.1} parent=95 // pred_fallthru
          _
        // Predicated region
        $region125: #{bce_dice_loss.1} parent=95 // pred_check
          %p775 = pneg %p181
        $region126: #{bce_dice_loss.1} parent=95 // pred_check_branch
          %777 = sbr.rel (%p775) target = $region128
        $region127: #{bce_dice_loss.1} parent=95 // pred_region
          _
        $region128: #{bce_dice_loss.1} parent=95 // pred_fallthru
          _
      $region96: #{bce_dice_loss.1} parent=5 // pred_fallthru
        _
      %p778 = scmp.le.s32.totalorder 2, %s12
      // Predicated region
      $region129: #{bce_dice_loss.1} parent=5 // pred_check
        %p779 = pneg %p778
      $region130: #{bce_dice_loss.1} parent=5 // pred_check_branch
        %781 = sbr.rel (%p779) target = $region132
      $region131: #{bce_dice_loss.1} parent=5 // pred_region
        %s782 = ssub.s32 %s12, 2
        // Predicated region
        $region133: #{bce_dice_loss.1} parent=131 // pred_check
          %p783 = pneg %p109
        $region134: #{bce_dice_loss.1} parent=131 // pred_check_branch
          %785 = sbr.rel (%p783) target = $region136
        $region135: #{bce_dice_loss.1} parent=131 // pred_region
          %p786 = scmp.lt.s32.totalorder %s23, 1
          %s787 = scalar_select %p786, %s23, 1
          %s788 = smul.addr %s787, 2
          %s789 = scalar_lea.vmem %s2, %s788
        $region136: #{bce_dice_loss.1} parent=131 // pred_fallthru
          _
        // Predicated region
        $region137: #{bce_dice_loss.1} parent=131 // pred_check
          %p790 = pneg %p135
        $region138: #{bce_dice_loss.1} parent=131 // pred_check_branch
          %792 = sbr.rel (%p790) target = $region140
        $region139: #{bce_dice_loss.1} parent=131 // pred_region
          %p793 = scmp.lt.s32.totalorder %s23, 1
          %s794 = scalar_select %p793, %s23, 1
          %s795 = smul.addr %s794, 2
          %s796 = scalar_lea.vmem %s3, %s795
        $region140: #{bce_dice_loss.1} parent=131 // pred_fallthru
          _
        // Predicated region
        $region141: #{bce_dice_loss.1} parent=131 // pred_check
          %p797 = pneg %p161
        $region142: #{bce_dice_loss.1} parent=131 // pred_check_branch
          %799 = sbr.rel (%p797) target = $region144
        $region143: #{bce_dice_loss.1} parent=131 // pred_region
          %p800 = scmp.lt.s32.totalorder %s23, 1
          %s801 = scalar_select %p800, %s23, 1
          %s802 = smul.addr %s801, 2
          %s803 = scalar_lea.vmem %s4, %s802
        $region144: #{bce_dice_loss.1} parent=131 // pred_fallthru
          _
        // Predicated region
        $region145: #{bce_dice_loss.1} parent=131 // pred_check
          %p804 = pneg %p187
        $region146: #{bce_dice_loss.1} parent=131 // pred_check_branch
          %806 = sbr.rel (%p804) target = $region148
        $region147: #{bce_dice_loss.1} parent=131 // pred_region
          %p807 = scmp.lt.s32.totalorder %s23, 1
          %s808 = scalar_select %p807, %s23, 1
          %s809 = smul.addr %s808, 2
          %s810 = scalar_lea.vmem %s5, %s809
        $region148: #{bce_dice_loss.1} parent=131 // pred_fallthru
          _
      $region132: #{bce_dice_loss.1} parent=5 // pred_fallthru
        _
    $region6: #{bce_dice_loss.1} parent=1 // loop_footer
      %s16 = sadd.s32 1, %s12
    $region7: #{bce_dice_loss.1} parent=1 // loop_footer_branch
      %11 = sbr.rel target = $region3
    $region8: #{bce_dice_loss.1} parent=1 // loop_exit
      _

</llo_original>
